<compile_context>
chip_gen: v7x
topology: tpu7x:2x2x1
jax: 0.10.0
libtpu: 0.0.40
codegen_flags: <defaults>
</compile_context>

<pallas_src>
import jax
import jax.numpy as jnp
from jax.experimental import pallas as pl
from jax.experimental.pallas import tpu as pltpu

_LANE = 128


def _vardrop_kernel(mask_ref, x_ref, o_ref):
    # mask_ref: (1, 1, tH)  -- identical for every T tile of this batch element.
    # x_ref / o_ref: (1, tT, tH)
    o_ref[...] = x_ref[...] * mask_ref[...]


def _block_cap_bytes():
    """Per-generation x-tile byte budget (one block; in + out are double-buffered)."""
    try:
        vmem = pltpu.get_tpu_info().vmem_capacity_bytes
        if vmem <= 64 * 1024 * 1024:       # v7x-class: fast HBM, 64 MiB VMEM
            return 6 * 1024 * 1024         # 4 x 6 MiB = 24 MiB << 64 MiB, <10% step overhead
    except Exception:
        pass
    return 4 * 1024 * 1024                 # v5e / v6e knee (~86% of HBM roofline)


def _pick_tiles(T, H, itemsize, max_block_bytes):
    """(tT, tH): T tile rounded to the packed-sublane multiple, H tile a multiple of 128."""
    sub = 8 * max(1, 4 // itemsize)        # 8 for f32, 16 for bf16, 32 for int8/fp8
    if H <= _LANE or sub * H * itemsize <= max_block_bytes:
        tH = H                             # keep the whole hidden dim (lane-dense)
    else:                                  # very large H: tile it in multiples of 128
        tH = (max_block_bytes // (sub * itemsize * _LANE)) * _LANE
        tH = max(_LANE, min(tH, H))
    rows = max_block_bytes // max(1, tH * itemsize)
    tT = max(sub, (rows // sub) * sub)
    return min(T, tT), tH


def variational_dropout(x, key, *, dropout=0.5, training=True, donate_x=False):
    """x: (B, T, H).  Same Bernoulli mask (scaled by 1/keep_prob) for every time step."""
    if not training or dropout == 0.0:
        return x
    if dropout >= 1.0:
        # keep_prob == 0: PyTorch's .div_(0) would give NaN/Inf; everything is dropped.
        return jnp.zeros_like(x)

    B, T, H = x.shape
    keep_prob = 1.0 - dropout

    # PyTorch: x.new_empty(B, 1, H).bernoulli_(1 - p).div_(1 - p) -> mask in x.dtype.
    keep = jax.random.bernoulli(key, p=keep_prob, shape=(B, 1, H))
    mask = keep.astype(x.dtype) / jnp.asarray(keep_prob, dtype=x.dtype)

    # Lane-dense output: pad H up to a multiple of 128, slice back afterwards.
    Hp = ((H + _LANE - 1) // _LANE) * _LANE
    if Hp != H:
        x_in = jnp.pad(x, ((0, 0), (0, 0), (0, Hp - H)))
        mask_in = jnp.pad(mask, ((0, 0), (0, 0), (0, Hp - H)))
    else:
        x_in, mask_in = x, mask

    itemsize = x.dtype.itemsize
    tT, tH = _pick_tiles(T, Hp, itemsize, _block_cap_bytes())
    grid = (B, pl.cdiv(T, tT), pl.cdiv(Hp, tH))

    # Double-buffered x-in + out blocks, double-buffered mask strip, plus slack.
    block_bytes = tT * tH * itemsize
    vmem_limit = int(min(
        48 * 1024 * 1024,
        max(16 * 1024 * 1024, 4 * block_bytes + 2 * tH * itemsize + (2 << 20)),
    ))

    out = pl.pallas_call(
        _vardrop_kernel,
        out_shape=jax.ShapeDtypeStruct((B, T, Hp), x.dtype),
        grid=grid,
        in_specs=[
            pl.BlockSpec((1, 1, tH), lambda b, t, h: (b, 0, h)),    # mask, reused over T
            pl.BlockSpec((1, tT, tH), lambda b, t, h: (b, t, h)),   # x tile
        ],
        out_specs=pl.BlockSpec((1, tT, tH), lambda b, t, h: (b, t, h)),
        compiler_params=pltpu.CompilerParams(
            dimension_semantics=("parallel", "parallel", "parallel"),
            vmem_limit_bytes=vmem_limit,
        ),
        cost_estimate=pl.CostEstimate(
            flops=B * T * Hp,
            bytes_accessed=(2 * B * T * Hp + B * Hp) * itemsize,
            transcendentals=0,
        ),
        input_output_aliases=({1: 0} if donate_x else {}),
    )(mask_in, x_in)

    return out[..., :H] if Hp != H else out


if __name__ == "__main__":
    # Small shapes consistent with the module's (batch, time, hidden) input.
    B, T, H = 2, 8, 128
    dropout = 0.5

    key = jax.random.PRNGKey(0)
    kx, km = jax.random.split(key)
    x = jax.random.normal(kx, (B, T, H), dtype=jnp.float32)

    out = variational_dropout(x, km, dropout=dropout, training=True)
    out = jax.block_until_ready(out)

    # Reference (same RNG draw as the wrapper): mask sampled once per (B, H),
    # scaled by 1/keep_prob, broadcast over T.
    keep_prob = 1.0 - dropout
    keep_ref = jax.random.bernoulli(km, p=keep_prob, shape=(B, 1, H))
    mask_ref = keep_ref.astype(x.dtype) / jnp.asarray(keep_prob, dtype=x.dtype)
    expected = x * mask_ref
    assert bool(jnp.allclose(out, expected)), "kernel output must equal x * mask"

    # Mask must be identical across the time axis.
    is_zero = jnp.isclose(out, 0.0)
    zero_pattern = jnp.where(is_zero, 0.0, 1.0)
    assert bool(jnp.all(zero_pattern == zero_pattern[:, :1, :])), \
        "mask must be shared across time"

    # Non-multiple-of-128 hidden dim exercises the lane-padding path.
    H2 = 96
    x2 = jax.random.normal(kx, (B, T, H2), dtype=jnp.float32)
    out2 = jax.block_until_ready(variational_dropout(x2, km, dropout=dropout, training=True))
    keep2 = jax.random.bernoulli(km, p=keep_prob, shape=(B, 1, H2))
    mask2 = keep2.astype(x2.dtype) / jnp.asarray(keep_prob, dtype=x2.dtype)
    assert bool(jnp.allclose(out2, x2 * mask2)), "padded-H path must match reference"

    # Eval mode is the identity.
    out_eval = jax.block_until_ready(
        variational_dropout(x, km, dropout=dropout, training=False)
    )
    assert bool(jnp.all(out_eval == x))

    print("KERNEL_OK")
</pallas_src>

<mosaic_0001>
module attributes {stable_mosaic.version = 11 : i64} {
  func.func @_vardrop_kernel(%arg0: i32, %arg1: i32, %arg2: i32, %arg3: memref<1x1x128xf32, #tpu.memory_space<vmem>>, %arg4: memref<1x8x128xf32, #tpu.memory_space<vmem>>, %arg5: memref<1x8x128xf32, #tpu.memory_space<vmem>>) attributes {dimension_semantics = [#tpu.dimension_semantics<parallel>, #tpu.dimension_semantics<parallel>, #tpu.dimension_semantics<parallel>], iteration_bounds = array<i64: 2, 1, 1>, scalar_prefetch = 0 : i64, scratch_operands = 0 : i64, tpu.core_type = #tpu.core_type<tc>, window_params = [{transform_indices = @transform_0, window_bounds = array<i64: 1, 1, 128>}, {transform_indices = @transform_1, window_bounds = array<i64: 1, 8, 128>}, {transform_indices = @transform_2, window_bounds = array<i64: 1, 8, 128>}]} {
    %c0 = arith.constant 0 : index
    %c0_0 = arith.constant 0 : index
    %c0_1 = arith.constant 0 : index
    %0 = vector.load %arg4[%c0, %c0_0, %c0_1] : memref<1x8x128xf32, #tpu.memory_space<vmem>>, vector<1x8x128xf32>
    %c0_2 = arith.constant 0 : index
    %c0_3 = arith.constant 0 : index
    %c0_4 = arith.constant 0 : index
    %1 = vector.load %arg3[%c0_2, %c0_3, %c0_4] : memref<1x1x128xf32, #tpu.memory_space<vmem>>, vector<1x1x128xf32>
    %2 = vector.broadcast %1 : vector<1x1x128xf32> to vector<1x8x128xf32>
    %3 = arith.mulf %0, %2 : vector<1x8x128xf32>
    %c0_5 = arith.constant 0 : index
    %c0_6 = arith.constant 0 : index
    %c0_7 = arith.constant 0 : index
    %4 = vector.load %arg5[%c0_5, %c0_6, %c0_7] : memref<1x8x128xf32, #tpu.memory_space<vmem>>, vector<1x8x128xf32>
    tpu.vector_store %arg5[%c0_5, %c0_6, %c0_7], %3 {strides = array<i32>} : memref<1x8x128xf32, #tpu.memory_space<vmem>>, vector<1x8x128xf32>,
    return
  }
  func.func @transform_0(%arg0: i32, %arg1: i32, %arg2: i32) -> (i32, i32, i32) {
    %c0_i32 = arith.constant 0 : i32
    %c0_i32_0 = arith.constant 0 : i32
    return %arg0, %c0_i32, %arg2 : i32, i32, i32
  }
  func.func @transform_1(%arg0: i32, %arg1: i32, %arg2: i32) -> (i32, i32, i32) {
    %c0_i32 = arith.constant 0 : i32
    return %arg0, %arg1, %arg2 : i32, i32, i32
  }
  func.func @transform_2(%arg0: i32, %arg1: i32, %arg2: i32) -> (i32, i32, i32) {
    %c0_i32 = arith.constant 0 : i32
    return %arg0, %arg1, %arg2 : i32, i32, i32
  }
}

</mosaic_0001>

<llo_original>
// kernel: tpu_custom_call.1
$region0: #{tpu_custom_call.1}
  #allocation0 [shape = 'u32[]', space=smem, size = 0x4, offset = 0x4, fixed_abs, tag = 'smem constant byte address 0x4 - core index']
  #allocation1 [shape = 'u32[144,128]{1,0:T(1,128)}', space=vmem, size = 0x12000, scoped, tag = 'internal scratch']
  %s0 = inlined_call_operand.hbm [shape: f32[2,1,128], index: 0, kind: input, shape index: {}]
  %s1 = inlined_call_operand.hbm [shape: f32[2,8,128], index: 1, kind: input, shape index: {}]
  %s2 = inlined_call_operand.hbm [shape: f32[2,8,128], index: 2, kind: output, shape index: {}]
  %s3 = sld [smem:[#allocation0]]
  $region49: #{tpu_custom_call.1} parent=0
    _
  %s5 = ssub.s32 1, %s3
  %s6 = scalar_select 0, %s5, %s3
  $region1: #{tpu_custom_call.1} parent=0
    #allocation2 [shape = 'u8[1024]{0}', space=vmem, size = 0x400, scoped, tag = 'input window, operand 0']
    #allocation3 [shape = 's32[2]{0}', space=sflag, size = 0x8, scoped, tag = 'scoped memory for tpu_custom_call.1']
    #allocation4 [shape = 's32[2]{0}', space=sflag, size = 0x8, scoped, tag = 'scoped memory for tpu_custom_call.1']
    #allocation5 [shape = 'u8[8192]{0}', space=vmem, size = 0x2000, scoped, tag = 'input window, operand 1']
    #allocation6 [shape = 's32[2]{0}', space=sflag, size = 0x8, scoped, tag = 'scoped memory for tpu_custom_call.1']
    #allocation7 [shape = 'u8[8192]{0}', space=vmem, size = 0x2000, scoped, tag = 'output window, operand 0']
    %7 = vsyncpa [#allocation3], 0
    %s8 = scalar_lea.sflag [#allocation3], 1
    %9 = vsyncpa %s8, 0
    %10 = vsyncpa [#allocation6], 0
    %s11 = scalar_lea.sflag [#allocation6], 1
    %12 = vsyncpa %s11, 0
    %13 = vsyncpa [#allocation4], 0
    %s14 = scalar_lea.sflag [#allocation4], 1
    %15 = vsyncpa %s14, 0
    loop: start=0, step=1, limit=4
    $region2: #{tpu_custom_call.1} parent=1 // loop_pre_header
      _
    $region3: #{tpu_custom_call.1} parent=1 // loop_header
      %s17 = sphi 0, %s21
      %p18 = scmp.ge.s32.totalorder %s17, 4
      %s24 = sphi 0, %s43
      %s25 = sphi 0, %s39
      %s26 = sphi 0, %s35
      %s27 = sphi 0, %s24
      %s28 = sphi 0, %s25
      %s29 = sphi 0, %s26
      %s30 = sphi 0, %s27
      %s31 = sphi 0, %s28
      %s32 = sphi 0, %s29
      %s48 = sphi 0, %s50
      %s51 = sphi 0, %s48
      %s52 = sphi 0, %s51
      %s68 = sphi 0, %s52
      %s78 = sphi 0, %s80
      %s81 = sphi 0, %s78
      %s82 = sphi 0, %s81
      %s98 = sphi 0, %s82
      %s108 = sphi 0, %s110
      %s111 = sphi 0, %s108
      %s112 = sphi 0, %s111
      %s128 = sphi 0, %s112
    $region4: #{tpu_custom_call.1} parent=1 // loop_header_branch
      %20 = sbr.rel (%p18) target = $region8
    $region5: #{tpu_custom_call.1} parent=1 // loop_body
      %s22 = ssub.s32 %s17, 1
      %s23 = ssub.s32 %s17, 2
      %s33 = sadd.s32 1, %s26
      %p34 = scmp.ge.s32.totalorder %s33, 1
      %s35 = scalar_select %p34, 0, %s33
      %s36 = sadd.s32 1, %s25
      %s37 = scalar_select %p34, %s36, %s25
      %p38 = scmp.ge.s32.totalorder %s37, 1
      %s39 = scalar_select %p38, 0, %s37
      %s40 = sadd.s32 1, %s24
      %s41 = scalar_select %p38, %s40, %s24
      %p42 = scmp.ge.s32.totalorder %s41, 2
      %s43 = scalar_select %p42, 0, %s41
      %s44 = ssub.s32 %s24, %s43
      %s45 = ssub.s32 %s26, %s35
      %s46 = sor.u32 %s44, %s45
      %p47 = scmp.eq.s32.totalorder %s46, 0
      %s49 = sadd.s32 %s48, 1
      %s50 = scalar_select %p47, %s48, %s49
      %p53 = pneg %p47
      %p54 = scmp.eq.s32.totalorder %s17, 1
      %p55 = por %p53, %p54
      %p56 = scmp.ne.s32.totalorder %s48, %s51
      %p57 = scmp.eq.s32.totalorder %s17, 0
      %p58 = por %p56, %p57
      %p59 = scmp.ne.s32.totalorder %s48, %s51
      %p60 = scmp.eq.s32.totalorder %s22, 1
      %p61 = por %p59, %p60
      %p62 = scmp.ne.s32.totalorder %s51, %s52
      %p63 = scmp.eq.s32.totalorder %s22, 0
      %p64 = por %p62, %p63
      %p65 = scmp.ne.s32.totalorder %s51, %s52
      %p66 = scmp.eq.s32.totalorder %s23, 1
      %p67 = por %p65, %p66
      %p69 = scmp.ne.s32.totalorder %s52, %s68
      %p70 = scmp.eq.s32.totalorder %s23, 0
      %p71 = por %p69, %p70
      %s72 = ssub.s32 %s24, %s43
      %s73 = ssub.s32 %s25, %s39
      %s74 = sor.u32 %s72, %s73
      %s75 = ssub.s32 %s26, %s35
      %s76 = sor.u32 %s74, %s75
      %p77 = scmp.eq.s32.totalorder %s76, 0
      %s79 = sadd.s32 %s78, 1
      %s80 = scalar_select %p77, %s78, %s79
      %p83 = pneg %p77
      %p84 = scmp.eq.s32.totalorder %s17, 1
      %p85 = por %p83, %p84
      %p86 = scmp.ne.s32.totalorder %s78, %s81
      %p87 = scmp.eq.s32.totalorder %s17, 0
      %p88 = por %p86, %p87
      %p89 = scmp.ne.s32.totalorder %s78, %s81
      %p90 = scmp.eq.s32.totalorder %s22, 1
      %p91 = por %p89, %p90
      %p92 = scmp.ne.s32.totalorder %s81, %s82
      %p93 = scmp.eq.s32.totalorder %s22, 0
      %p94 = por %p92, %p93
      %p95 = scmp.ne.s32.totalorder %s81, %s82
      %p96 = scmp.eq.s32.totalorder %s23, 1
      %p97 = por %p95, %p96
      %p99 = scmp.ne.s32.totalorder %s82, %s98
      %p100 = scmp.eq.s32.totalorder %s23, 0
      %p101 = por %p99, %p100
      %s102 = ssub.s32 %s24, %s43
      %s103 = ssub.s32 %s25, %s39
      %s104 = sor.u32 %s102, %s103
      %s105 = ssub.s32 %s26, %s35
      %s106 = sor.u32 %s104, %s105
      %p107 = scmp.eq.s32.totalorder %s106, 0
      %s109 = sadd.s32 %s108, 1
      %s110 = scalar_select %p107, %s108, %s109
      %p113 = pneg %p107
      %p114 = scmp.eq.s32.totalorder %s17, 1
      %p115 = por %p113, %p114
      %p116 = scmp.ne.s32.totalorder %s108, %s111
      %p117 = scmp.eq.s32.totalorder %s17, 0
      %p118 = por %p116, %p117
      %p119 = scmp.ne.s32.totalorder %s108, %s111
      %p120 = scmp.eq.s32.totalorder %s22, 1
      %p121 = por %p119, %p120
      %p122 = scmp.ne.s32.totalorder %s111, %s112
      %p123 = scmp.eq.s32.totalorder %s22, 0
      %p124 = por %p122, %p123
      %p125 = scmp.ne.s32.totalorder %s111, %s112
      %p126 = scmp.eq.s32.totalorder %s23, 1
      %p127 = por %p125, %p126
      %p129 = scmp.ne.s32.totalorder %s112, %s128
      %p130 = scmp.eq.s32.totalorder %s23, 0
      %p131 = por %p129, %p130
      %p132 = scmp.le.s32.totalorder 1, %s17
      %p133 = scmp.lt.s32.totalorder %s17, 3
      %p134 = pnand %p132, %p133
      %p135 = pneg %p134
      // Predicated region
      $region9: #{tpu_custom_call.1} parent=5 // pred_check
        _
      $region10: #{tpu_custom_call.1} parent=5 // pred_check_branch
        %137 = sbr.rel (%p134) target = $region12
      $region11: #{tpu_custom_call.1} parent=5 // pred_region
        %s138 = ssub.s32 %s17, 1
      $region12: #{tpu_custom_call.1} parent=5 // pred_fallthru
        _
      %p139 = scmp.lt.s32.totalorder %s17, 2
      // Predicated region
      $region13: #{tpu_custom_call.1} parent=5 // pred_check
        %p140 = pneg %p139
      $region14: #{tpu_custom_call.1} parent=5 // pred_check_branch
        %142 = sbr.rel (%p140) target = $region16
      $region15: #{tpu_custom_call.1} parent=5 // pred_region
        // Predicated region
        $region17: #{tpu_custom_call.1} parent=15 // pred_check
          %p143 = pneg %p58
        $region18: #{tpu_custom_call.1} parent=15 // pred_check_branch
          %145 = sbr.rel (%p143) target = $region20
        $region19: #{tpu_custom_call.1} parent=15 // pred_region
          %s146 = sand.u32 %s48, 1
          %s147 = scalar_lea.sflag [#allocation3], %s146
          %s148 = sand.u32 %s48, 1
          %s149 = scalar_lea.vmem [#allocation2], %s148
          %s151 = ssub.s32 16, 16
          %152 = vsyncadd %s147, %s151
          %s153 = sadd.s32 %s26, %s24
          %s154 = smul.addr %s153, 16
          %s155 = scalar_lea.hbm %s0, %s154
          %s157 = sshll.u32 %s149, 4
          %s158 = int_to_ptr.vmem [resolvable:$true] %s157
          %160 = dma.hbm_to_vmem [thread:$0]  %s155, 16, %s158, %s147
        $region20: #{tpu_custom_call.1} parent=15 // pred_fallthru
          _
        // Predicated region
        $region21: #{tpu_custom_call.1} parent=15 // pred_check
          %p161 = pneg %p88
        $region22: #{tpu_custom_call.1} parent=15 // pred_check_branch
          %163 = sbr.rel (%p161) target = $region24
        $region23: #{tpu_custom_call.1} parent=15 // pred_region
          %s164 = sand.u32 %s78, 1
          %s165 = scalar_lea.sflag [#allocation6], %s164
          %s166 = sand.u32 %s78, 1
          %s167 = smul.addr %s166, 8
          %s168 = scalar_lea.vmem [#allocation5], %s167
          %s170 = ssub.s32 128, 128
          %171 = vsyncadd %s165, %s170
          %s172 = sadd.s32 %s26, %s25
          %s173 = sadd.s32 %s172, %s24
          %s174 = smul.addr %s173, 128
          %s175 = scalar_lea.hbm %s1, %s174
          %s177 = sshll.u32 %s168, 4
          %s178 = int_to_ptr.vmem [resolvable:$true] %s177
          %180 = dma.hbm_to_vmem [thread:$0]  %s175, 128, %s178, %s165
        $region24: #{tpu_custom_call.1} parent=15 // pred_fallthru
          _
      $region16: #{tpu_custom_call.1} parent=5 // pred_fallthru
        _
      %p181 = scmp.le.s32.totalorder 1, %s17
      %p182 = scmp.lt.s32.totalorder %s17, 3
      %p183 = pnand %p181, %p182
      %p184 = pneg %p183
      // Predicated region
      $region25: #{tpu_custom_call.1} parent=5 // pred_check
        _
      $region26: #{tpu_custom_call.1} parent=5 // pred_check_branch
        %186 = sbr.rel (%p183) target = $region28
      $region27: #{tpu_custom_call.1} parent=5 // pred_region
        %s187 = ssub.s32 %s17, 1
        %s188 = sand.u32 %s51, 1
        %s189 = scalar_lea.sflag [#allocation3], %s188
        %s190 = sand.u32 %s51, 1
        %s191 = scalar_lea.vmem [#allocation2], %s190
        // Predicated region
        $region29: #{tpu_custom_call.1} parent=27 // pred_check
          %p192 = pneg %p64
        $region30: #{tpu_custom_call.1} parent=27 // pred_check_branch
          %194 = sbr.rel (%p192) target = $region32
        $region31: #{tpu_custom_call.1} parent=27 // pred_region
          %195 = dma.done %s189, 16
        $region32: #{tpu_custom_call.1} parent=27 // pred_fallthru
          _
        %s196 = sand.u32 %s81, 1
        %s197 = scalar_lea.sflag [#allocation6], %s196
        %s198 = sand.u32 %s81, 1
        %s199 = smul.addr %s198, 8
        %s200 = scalar_lea.vmem [#allocation5], %s199
        // Predicated region
        $region33: #{tpu_custom_call.1} parent=27 // pred_check
          %p201 = pneg %p94
        $region34: #{tpu_custom_call.1} parent=27 // pred_check_branch
          %203 = sbr.rel (%p201) target = $region36
        $region35: #{tpu_custom_call.1} parent=27 // pred_region
          %204 = dma.done %s197, 128
        $region36: #{tpu_custom_call.1} parent=27 // pred_fallthru
          _
        %s205 = sand.u32 %s51, 1
        %s206 = scalar_lea.sflag [#allocation3], %s205
        %s207 = sand.u32 %s51, 1
        %s208 = scalar_lea.vmem [#allocation2], %s207
        %p209 = pneg %p64
        %p210 = pneg %p61
        %s211 = sand.u32 %s81, 1
        %s212 = scalar_lea.sflag [#allocation6], %s211
        %s213 = sand.u32 %s81, 1
        %s214 = smul.addr %s213, 8
        %s215 = scalar_lea.vmem [#allocation5], %s214
        %p216 = pneg %p94
        %p217 = pneg %p91
        %p218 = pneg %p124
        %p219 = pneg %p121
        %s220 = sand.u32 %s111, 1
        %s221 = scalar_lea.sflag [#allocation4], %s220
        %s222 = sand.u32 %s111, 1
        %s223 = smul.addr %s222, 8
        %s224 = scalar_lea.vmem [#allocation7], %s223
        %v225 = vld [vmem:[%s200] sm:$0xff]
        %v226 = vld [vmem:[%s191] sm:$0x1]
        %v228 = vlaneseq
        %v229 = vshrl.u32 %v228, 7
        %v230 = vsub.s32 0, %v229
        %v231 = vrot.slane %v226, %v230
        %v233 = vmul.f32 %v225, %v231
        %234 = vst [vmem:[%s224] sm:$0xff] %v233
        %s235 = sand.u32 %s111, 1
        %s236 = scalar_lea.sflag [#allocation4], %s235
        %s237 = sand.u32 %s111, 1
        %s238 = smul.addr %s237, 8
        %s239 = scalar_lea.vmem [#allocation7], %s238
        // Predicated region
        $region37: #{tpu_custom_call.1} parent=27 // pred_check
          %p240 = pneg %p121
        $region38: #{tpu_custom_call.1} parent=27 // pred_check_branch
          %242 = sbr.rel (%p240) target = $region40
        $region39: #{tpu_custom_call.1} parent=27 // pred_region
          %s244 = ssub.s32 128, 128
          %245 = vsyncadd %s236, %s244
          %s246 = sadd.s32 %s29, %s28
          %s247 = sadd.s32 %s246, %s27
          %s248 = smul.addr %s247, 128
          %s249 = scalar_lea.hbm %s2, %s248
          %s251 = sshll.u32 %s239, 4
          %s252 = int_to_ptr.vmem [resolvable:$true] %s251
          %254 = dma.vmem_to_hbm [thread:$0]  %s252, 128, %s249, %s236
        $region40: #{tpu_custom_call.1} parent=27 // pred_fallthru
          _
      $region28: #{tpu_custom_call.1} parent=5 // pred_fallthru
        _
      %p255 = scmp.le.s32.totalorder 2, %s17
      // Predicated region
      $region41: #{tpu_custom_call.1} parent=5 // pred_check
        %p256 = pneg %p255
      $region42: #{tpu_custom_call.1} parent=5 // pred_check_branch
        %258 = sbr.rel (%p256) target = $region44
      $region43: #{tpu_custom_call.1} parent=5 // pred_region
        %s259 = ssub.s32 %s17, 2
        // Predicated region
        $region45: #{tpu_custom_call.1} parent=43 // pred_check
          %p260 = pneg %p127
        $region46: #{tpu_custom_call.1} parent=43 // pred_check_branch
          %262 = sbr.rel (%p260) target = $region48
        $region47: #{tpu_custom_call.1} parent=43 // pred_region
          %s263 = sand.u32 %s112, 1
          %s264 = scalar_lea.sflag [#allocation4], %s263
          %s265 = sand.u32 %s112, 1
          %s266 = smul.addr %s265, 8
          %s267 = scalar_lea.vmem [#allocation7], %s266
          %268 = dma.done %s264, 128
        $region48: #{tpu_custom_call.1} parent=43 // pred_fallthru
          _
      $region44: #{tpu_custom_call.1} parent=5 // pred_fallthru
        _
    $region6: #{tpu_custom_call.1} parent=1 // loop_footer
      %s21 = sadd.s32 1, %s17
    $region7: #{tpu_custom_call.1} parent=1 // loop_footer_branch
      %16 = sbr.rel target = $region3
    $region8: #{tpu_custom_call.1} parent=1 // loop_exit
      _
    %269 = vsyncpa [#allocation3], 1
    %s270 = scalar_lea.sflag [#allocation3], 1
    %271 = vsyncpa %s270, 1
    %272 = vsyncpa [#allocation6], 1
    %s273 = scalar_lea.sflag [#allocation6], 1
    %274 = vsyncpa %s273, 1
    %275 = vsyncpa [#allocation4], 1
    %s276 = scalar_lea.sflag [#allocation4], 1
    %277 = vsyncpa %s276, 1

</llo_original>
